<compile_context>
chip_gen: v5e
topology: v5e:2x2
jax: 0.10.0
libtpu: 0.0.40
codegen_flags: <defaults>
</compile_context>

<pallas_src>
import functools
import math

import jax
import jax.numpy as jnp
from jax.experimental import pallas as pl
from jax.experimental.pallas import tpu as pltpu


def _round_up(x, m):
    return ((x + m - 1) // m) * m


def _sublane_multiple(dtype):
    # f32 -> 8, bf16 -> 16, int8/fp8 -> 32
    itemsize = jnp.dtype(dtype).itemsize
    return max(8, 32 // itemsize)


def _pick_tile(dim_pad, unit, cap):
    """Largest multiple-of-`unit` divisor of dim_pad that is <= cap (>= unit)."""
    n = dim_pad // unit
    best = 1
    d = 1
    while d * d <= n:
        if n % d == 0:
            for c in (d, n // d):
                if c * unit <= cap and c > best:
                    best = c
        d += 1
    return best * unit


# ---------------------------------------------------------------------------
# Kernels
# ---------------------------------------------------------------------------
def _equal_linear_kernel_single_k(x_ref, w_ref, b_ref, o_ref, *, scale):
    # x_ref: (tm, K); w_ref: (K, tn); b_ref: (1, tn); o_ref: (tm, tn)
    acc = jnp.dot(x_ref[...], w_ref[...], preferred_element_type=jnp.float32)
    o_ref[...] = (acc * scale + b_ref[...].astype(jnp.float32)).astype(o_ref.dtype)


def _equal_linear_kernel_k_loop(x_ref, w_ref, b_ref, o_ref, acc_ref, *, scale):
    # x_ref: (tm, tk); w_ref: (tk, tn); b_ref: (1, tn); o_ref: (tm, tn)
    k = pl.program_id(2)
    partial = jnp.dot(x_ref[...], w_ref[...], preferred_element_type=jnp.float32)

    @pl.when(k == 0)
    def _():
        acc_ref[...] = partial            # direct assign: no zero-fill pass

    @pl.when(k != 0)
    def _():
        acc_ref[...] += partial

    @pl.when(k == pl.num_programs(2) - 1)
    def _():
        o_ref[...] = (acc_ref[...] * scale
                      + b_ref[...].astype(jnp.float32)).astype(o_ref.dtype)


# ---------------------------------------------------------------------------
# One-time parameter prep (hoisted out of the per-call path)
# ---------------------------------------------------------------------------
def prepare_equal_linear_params(weight_orig, bias):
    """weight_orig: (out_dim, in_dim); bias: (out_dim,)."""
    out_dim, in_dim = weight_orig.shape
    assert bias.shape == (out_dim,)
    scale = float(math.sqrt(2.0 / in_dim))

    k_pad = _round_up(in_dim, 128)
    n_pad = _round_up(out_dim, 128)

    # (K, N) layout so the kernel contracts x's last dim with w's first dim
    # (native MXU feed, lane-dense along N). Done once, not per call.
    w_kn = weight_orig.T
    if (k_pad, n_pad) != (in_dim, out_dim):
        w_kn = jnp.pad(w_kn, ((0, k_pad - in_dim), (0, n_pad - out_dim)))

    b2d = bias.reshape(1, out_dim)
    if n_pad != out_dim:
        b2d = jnp.pad(b2d, ((0, 0), (0, n_pad - out_dim)))

    return {
        "w_kn": w_kn, "b2d": b2d, "scale": scale,
        "in_dim": in_dim, "out_dim": out_dim,
        "k_pad": k_pad, "n_pad": n_pad,
    }


# ---------------------------------------------------------------------------
# Forward
# ---------------------------------------------------------------------------
def equal_linear(x, params):
    """x: (B, in_dim) -> (B, out_dim)."""
    B, in_dim = x.shape
    assert in_dim == params["in_dim"]
    w_kn, b2d, scale = params["w_kn"], params["b2d"], params["scale"]
    out_dim, k_pad, n_pad = params["out_dim"], params["k_pad"], params["n_pad"]

    x_item = jnp.dtype(x.dtype).itemsize
    w_item = jnp.dtype(w_kn.dtype).itemsize
    m_align = _sublane_multiple(x.dtype)

    # ---- M tiling (x is small; padding it per call is cheap) ----
    tm = min(256, _round_up(B, m_align))
    m_pad = _round_up(B, tm)
    m_blocks = m_pad // tm

    # ---- N tiling: keep the whole weight resident in VMEM when it fits ----
    w_bytes = k_pad * n_pad * w_item
    weight_resident = w_bytes <= (6 << 20)
    if weight_resident:
        tn = n_pad
        # v7x: keep both TensorCores busy when there is only one M block.
        if m_blocks == 1 and n_pad >= 256 and (n_pad // 2) % 128 == 0:
            tn = n_pad // 2
    else:
        tn = _pick_tile(n_pad, 128, 256)
    n_blocks = n_pad // tn

    # ---- K tiling: collapse K to one block whenever the tiles fit VMEM ----
    def vmem_budget(tk_, extra_w_bufs=0):
        return (2 * (tm * tk_ * x_item + tk_ * tn * w_item
                     + tn * 4 + tm * tn * x_item)
                + extra_w_bufs * tk_ * tn * w_item
                + tm * tn * 4)

    single_k = vmem_budget(k_pad) <= (12 << 20)
    tk = k_pad if single_k else _pick_tile(k_pad, 128, 1024)
    k_blocks = k_pad // tk

    # ---- pad x (zero-padding is neutral for the contraction) ----
    if (m_pad, k_pad) != (B, in_dim):
        x = jnp.pad(x, ((0, m_pad - B), (0, k_pad - in_dim)))

    out_shape = jax.ShapeDtypeStruct((m_pad, n_pad), x.dtype)

    if k_blocks == 1:
        # Grid: N outer, M inner -> the weight block index is constant over the
        # inner M loop, so each weight block is DMA'd from HBM exactly once.
        grid = (n_blocks, m_blocks)
        kernel = functools.partial(_equal_linear_kernel_single_k, scale=scale)
        in_specs = [
            pl.BlockSpec((tm, tk), lambda j, i: (i, 0)),   # x
            pl.BlockSpec((tk, tn), lambda j, i: (0, j)),   # w (K, N)
            pl.BlockSpec((1, tn), lambda j, i: (0, j)),    # bias row
        ]
        out_specs = pl.BlockSpec((tm, tn), lambda j, i: (i, j))
        scratch_shapes = []
        dim_sem = ("parallel", "parallel")
        vmem_est = vmem_budget(tk)
    else:
        # Large in_dim fallback: K grid loop with f32 accumulator scratch.
        grid = (n_blocks, m_blocks, k_blocks)
        kernel = functools.partial(_equal_linear_kernel_k_loop, scale=scale)
        in_specs = [
            pl.BlockSpec((tm, tk), lambda j, i, k: (i, k)),                 # x
            pl.BlockSpec((tk, tn), lambda j, i, k: (k, j),
                         pipeline_mode=pl.Buffered(3)),                     # w (deep-buffered)
            pl.BlockSpec((1, tn), lambda j, i, k: (0, j)),                  # bias row
        ]
        out_specs = pl.BlockSpec((tm, tn), lambda j, i, k: (i, j))
        scratch_shapes = [pltpu.VMEM((tm, tn), jnp.float32)]
        dim_sem = ("parallel", "parallel", "arbitrary")
        vmem_est = vmem_budget(tk, extra_w_bufs=1)

    compiler_params = pltpu.CompilerParams(
        dimension_semantics=dim_sem,
        # Only raise the scoped-VMEM limit when the estimate actually exceeds the
        # smallest default (v5e: 16 MiB); stays well under v7x's 64 MiB physical.
        vmem_limit_bytes=(vmem_est + (4 << 20)) if vmem_est > (14 << 20) else None,
    )

    out_padded = pl.pallas_call(
        kernel,
        out_shape=out_shape,
        grid_spec=pltpu.PrefetchScalarGridSpec(
            num_scalar_prefetch=0,
            grid=grid,
            in_specs=in_specs,
            out_specs=out_specs,
            scratch_shapes=scratch_shapes,
        ),
        compiler_params=compiler_params,
    )(x, w_kn, b2d)

    if (m_pad, n_pad) != (B, out_dim):
        return out_padded[:B, :out_dim]
    return out_padded


# ---------------------------------------------------------------------------
if __name__ == "__main__":
    key = jax.random.PRNGKey(0)
    k_x, k_w = jax.random.split(key)

    batch, in_dim, out_dim = 8, 32, 64

    # Deterministic parameter init mirroring the module's __init__:
    #   linear.weight.data.normal_(); linear.bias.data.zero_()
    weight_orig = jax.random.normal(k_w, (out_dim, in_dim), dtype=jnp.float32)
    bias = jnp.zeros((out_dim,), dtype=jnp.float32)

    x = jax.random.normal(k_x, (batch, in_dim), dtype=jnp.float32)

    params = prepare_equal_linear_params(weight_orig, bias)  # one-time prep
    out = equal_linear(x, params)
    out = jax.block_until_ready(out)

    # Reference check in plain JAX (same math as the PyTorch forward).
    scale = math.sqrt(2.0 / in_dim)
    ref = x @ (weight_orig * scale).T + bias
    assert out.shape == (batch, out_dim)
    assert jnp.allclose(out, ref, atol=1e-5, rtol=1e-5), "mismatch vs reference"

    print("KERNEL_OK")
</pallas_src>

<mosaic_0001>
module attributes {stable_mosaic.version = 11 : i64} {
  func.func @_equal_linear_kernel_single_k(%arg0: i32, %arg1: i32, %arg2: memref<8x128xf32, #tpu.memory_space<vmem>>, %arg3: memref<128x128xf32, #tpu.memory_space<vmem>>, %arg4: memref<1x128xf32, #tpu.memory_space<vmem>>, %arg5: memref<8x128xf32, #tpu.memory_space<vmem>>) attributes {dimension_semantics = [#tpu.dimension_semantics<parallel>, #tpu.dimension_semantics<parallel>], iteration_bounds = array<i64: 1, 1>, scalar_prefetch = 0 : i64, scratch_operands = 0 : i64, tpu.core_type = #tpu.core_type<tc>, window_params = [{transform_indices = @transform_0, window_bounds = array<i64: 8, 128>}, {transform_indices = @transform_1, window_bounds = array<i64: 128, 128>}, {transform_indices = @transform_2, window_bounds = array<i64: 1, 128>}, {transform_indices = @transform_3, window_bounds = array<i64: 8, 128>}]} {
    %c0 = arith.constant 0 : index
    %c0_0 = arith.constant 0 : index
    %0 = vector.load %arg2[%c0, %c0_0] : memref<8x128xf32, #tpu.memory_space<vmem>>, vector<8x128xf32>
    %c0_1 = arith.constant 0 : index
    %c0_2 = arith.constant 0 : index
    %1 = vector.load %arg3[%c0_1, %c0_2] : memref<128x128xf32, #tpu.memory_space<vmem>>, vector<128x128xf32>
    %cst = arith.constant dense<0.000000e+00> : vector<8x128xf32>
    %2 = tpu.matmul %0, %1, %cst {dimension_numbers = #tpu.dot_dimension_numbers<[1], [0], [0], [1], [0, 0, 1, 1], [], []>} : vector<8x128xf32>, vector<128x128xf32>, vector<8x128xf32> -> vector<8x128xf32>
    %cst_3 = arith.constant 2.500000e-01 : f32
    %3 = vector.broadcast %cst_3 : f32 to vector<8x128xf32>
    %4 = arith.mulf %2, %3 : vector<8x128xf32>
    %c0_4 = arith.constant 0 : index
    %c0_5 = arith.constant 0 : index
    %5 = vector.load %arg4[%c0_4, %c0_5] : memref<1x128xf32, #tpu.memory_space<vmem>>, vector<1x128xf32>
    %6 = vector.broadcast %5 : vector<1x128xf32> to vector<8x128xf32>
    %7 = arith.addf %4, %6 : vector<8x128xf32>
    %c0_6 = arith.constant 0 : index
    %c0_7 = arith.constant 0 : index
    %8 = vector.load %arg5[%c0_6, %c0_7] : memref<8x128xf32, #tpu.memory_space<vmem>>, vector<8x128xf32>
    tpu.vector_store %arg5[%c0_6, %c0_7], %7 {strides = array<i32>} : memref<8x128xf32, #tpu.memory_space<vmem>>, vector<8x128xf32>,
    return
  }
  func.func @transform_0(%arg0: i32, %arg1: i32) -> (i32, i32) {
    %c0_i32 = arith.constant 0 : i32
    %c0_i32_0 = arith.constant 0 : i32
    return %arg1, %c0_i32 : i32, i32
  }
  func.func @transform_1(%arg0: i32, %arg1: i32) -> (i32, i32) {
    %c0_i32 = arith.constant 0 : i32
    %c0_i32_0 = arith.constant 0 : i32
    return %c0_i32, %arg0 : i32, i32
  }
  func.func @transform_2(%arg0: i32, %arg1: i32) -> (i32, i32) {
    %c0_i32 = arith.constant 0 : i32
    %c0_i32_0 = arith.constant 0 : i32
    return %c0_i32, %arg0 : i32, i32
  }
  func.func @transform_3(%arg0: i32, %arg1: i32) -> (i32, i32) {
    %c0_i32 = arith.constant 0 : i32
    return %arg1, %arg0 : i32, i32
  }
}

</mosaic_0001>

<llo_original>
// kernel: tpu_custom_call.1
$region0: #{tpu_custom_call.1}
  #allocation0 [shape = 'u32[]', space=smem, size = 0x4, offset = 0x4, fixed_abs, tag = 'smem constant byte address 0x4 - core index']
  #allocation1 [shape = 'u32[72,128]{1,0:T(1,128)}', space=vmem, size = 0x9000, scoped, tag = 'internal scratch']
  %s0 = inlined_call_operand.hbm [shape: f32[8,128], index: 0, kind: input, shape index: {}]
  %s1 = inlined_call_operand.hbm [shape: f32[128,128], index: 1, kind: input, shape index: {}]
  %s2 = inlined_call_operand.vmem [shape: f32[1,128], index: 2, kind: input, shape index: {}]
  %s3 = inlined_call_operand.hbm [shape: f32[8,128], index: 3, kind: output, shape index: {}]
  %s4 = sld [smem:[#allocation0]]
  $region30: #{tpu_custom_call.1} parent=0
    _
  %s6 = ssub.s32 1, %s4
  %s7 = scalar_select 0, %s6, %s4
  $region1: #{tpu_custom_call.1} parent=0
    #allocation2 [shape = 'u8[4096]{0}', space=vmem, size = 0x1000, scoped, tag = 'input window, operand 0, single buffered']
    #allocation3 [shape = 's32[1]{0}', space=sflag, size = 0x4, scoped, tag = 'scoped memory for tpu_custom_call.1']
    #allocation4 [shape = 's32[1]{0}', space=sflag, size = 0x4, scoped, tag = 'scoped memory for tpu_custom_call.1']
    #allocation5 [shape = 'u8[65536]{0}', space=vmem, size = 0x10000, scoped, tag = 'input window, operand 1, single buffered']
    #allocation6 [shape = 's32[1]{0}', space=sflag, size = 0x4, scoped, tag = 'scoped memory for tpu_custom_call.1']
    #allocation7 [shape = 'u8[4096]{0}', space=vmem, size = 0x1000, scoped, tag = 'output window, operand 0, single buffered']
    %8 = vsyncpa [#allocation3], 0
    %9 = vsyncpa [#allocation6], 0
    %10 = vsyncpa [#allocation4], 0
    // Predicated region
    $region2: #{tpu_custom_call.1} parent=1 // pred_check
      _
    $region3: #{tpu_custom_call.1} parent=1 // pred_check_branch
      %12 = sbr.rel (0) target = $region5
    $region4: #{tpu_custom_call.1} parent=1 // pred_region
      %14 = vsyncadd [#allocation3], 0
      %s16 = sshll.u32 %s0, 4
      %s17 = int_to_ptr.hbm [resolvable:$true] %s16
      %s18 = sshll.u32 [#allocation2], 4
      %s19 = int_to_ptr.vmem [resolvable:$true] %s18
      %21 = dma.hbm_to_vmem [thread:$0]  %s17, 128, %s19, [#allocation3]
    $region5: #{tpu_custom_call.1} parent=1 // pred_fallthru
      _
    // Predicated region
    $region6: #{tpu_custom_call.1} parent=1 // pred_check
      _
    $region7: #{tpu_custom_call.1} parent=1 // pred_check_branch
      %23 = sbr.rel (0) target = $region9
    $region8: #{tpu_custom_call.1} parent=1 // pred_region
      %25 = vsyncadd [#allocation6], 0
      %s26 = sshll.u32 %s1, 4
      %s27 = int_to_ptr.hbm [resolvable:$true] %s26
      %s28 = sshll.u32 [#allocation5], 4
      %s29 = int_to_ptr.vmem [resolvable:$true] %s28
      %34 = dma.hbm_to_vmem [thread:$0]  %s27, 2048, %s29, [#allocation6], 128, 128, 8
    $region9: #{tpu_custom_call.1} parent=1 // pred_fallthru
      _
    // Predicated region
    $region10: #{tpu_custom_call.1} parent=1 // pred_check
      _
    $region11: #{tpu_custom_call.1} parent=1 // pred_check_branch
      %36 = sbr.rel (0) target = $region13
    $region12: #{tpu_custom_call.1} parent=1 // pred_region
      _
    $region13: #{tpu_custom_call.1} parent=1 // pred_fallthru
      _
    // Predicated region
    $region14: #{tpu_custom_call.1} parent=1 // pred_check
      _
    $region15: #{tpu_custom_call.1} parent=1 // pred_check_branch
      %38 = sbr.rel (0) target = $region17
    $region16: #{tpu_custom_call.1} parent=1 // pred_region
      %40 = dma.done [#allocation3], 128
    $region17: #{tpu_custom_call.1} parent=1 // pred_fallthru
      _
    // Predicated region
    $region18: #{tpu_custom_call.1} parent=1 // pred_check
      _
    $region19: #{tpu_custom_call.1} parent=1 // pred_check_branch
      %42 = sbr.rel (0) target = $region21
    $region20: #{tpu_custom_call.1} parent=1 // pred_region
      %44 = dma.done [#allocation6], 2048
    $region21: #{tpu_custom_call.1} parent=1 // pred_fallthru
      _
    %v45 = vld [vmem:[#allocation2] sm:$0xff]
    %v46 = vld [vmem:[#allocation5] sm:$0xff]
    %v47 = vld [vmem:[#allocation5 + $0x8] sm:$0xff]
    %v48 = vld [vmem:[#allocation5 + $0x10] sm:$0xff]
    %v49 = vld [vmem:[#allocation5 + $0x18] sm:$0xff]
    %v50 = vld [vmem:[#allocation5 + $0x20] sm:$0xff]
    %v51 = vld [vmem:[#allocation5 + $0x28] sm:$0xff]
    %v52 = vld [vmem:[#allocation5 + $0x30] sm:$0xff]
    %v53 = vld [vmem:[#allocation5 + $0x38] sm:$0xff]
    %v54 = vld [vmem:[#allocation5 + $0x40] sm:$0xff]
    %v55 = vld [vmem:[#allocation5 + $0x48] sm:$0xff]
    %v56 = vld [vmem:[#allocation5 + $0x50] sm:$0xff]
    %v57 = vld [vmem:[#allocation5 + $0x58] sm:$0xff]
    %v58 = vld [vmem:[#allocation5 + $0x60] sm:$0xff]
    %v59 = vld [vmem:[#allocation5 + $0x68] sm:$0xff]
    %v60 = vld [vmem:[#allocation5 + $0x70] sm:$0xff]
    %v61 = vld [vmem:[#allocation5 + $0x78] sm:$0xff]
    %62 = vmatpush.msra.mxu0 %v61
    %63 = vmatpush.msra.mxu0 %v60
    %64 = vmatpush.msra.mxu0 %v59
    %65 = vmatpush.msra.mxu0 %v58
    %66 = vmatpush.msra.mxu0 %v57
    %67 = vmatpush.msra.mxu0 %v56
    %68 = vmatpush.msra.mxu0 %v55
    %69 = vmatpush.msra.mxu0 %v54
    %70 = vmatpush.msra.mxu0 %v53
    %71 = vmatpush.msra.mxu0 %v52
    %72 = vmatpush.msra.mxu0 %v51
    %73 = vmatpush.msra.mxu0 %v50
    %74 = vmatpush.msra.mxu0 %v49
    %75 = vmatpush.msra.mxu0 %v48
    %76 = vmatpush.msra.mxu0 %v47
    %77 = vmatpush.msra.mxu0 %v46
    %78 = vmatmul.f32.gmra.mxu0 %v45
    %v79 = vpop.f32.mrf.mxu0
    %v80 = vadd.f32 0.0, %v79
    %81 = vdwg.mxu0
    %v82 = vmul.f32 %v80, 0.25
    %v83 = vld [vmem:[%s2] sm:$0x1]
    %v85 = vperm.slane %v83, 0
    %v87 = vadd.f32 %v82, %v85
    %88 = vst [vmem:[#allocation7] sm:$0xff] %v87
    // Predicated region
    $region22: #{tpu_custom_call.1} parent=1 // pred_check
      _
    $region23: #{tpu_custom_call.1} parent=1 // pred_check_branch
      %90 = sbr.rel (0) target = $region25
    $region24: #{tpu_custom_call.1} parent=1 // pred_region
      %92 = vsyncadd [#allocation4], 0
      %s94 = sshll.u32 [#allocation7], 4
      %s95 = int_to_ptr.vmem [resolvable:$true] %s94
      %s96 = sshll.u32 %s3, 4
      %s97 = int_to_ptr.hbm [resolvable:$true] %s96
      %99 = dma.vmem_to_hbm [thread:$0]  %s95, 128, %s97, [#allocation4]
    $region25: #{tpu_custom_call.1} parent=1 // pred_fallthru
      _
    // Predicated region
    $region26: #{tpu_custom_call.1} parent=1 // pred_check
      _
    $region27: #{tpu_custom_call.1} parent=1 // pred_check_branch
      %101 = sbr.rel (0) target = $region29
    $region28: #{tpu_custom_call.1} parent=1 // pred_region
      %103 = dma.done [#allocation4], 128
    $region29: #{tpu_custom_call.1} parent=1 // pred_fallthru
      _
    %104 = vsyncpa [#allocation3], 1
    %105 = vsyncpa [#allocation6], 1
    %106 = vsyncpa [#allocation4], 1

</llo_original>
